<compile_context>
chip_gen: v7x
topology: tpu7x:2x2x1
jax: 0.10.0
libtpu: 0.0.40
codegen_flags: <defaults>
</compile_context>

<pallas_src>
import functools
import math

import jax
import jax.numpy as jnp
from jax.experimental import pallas as pl
from jax.experimental.pallas import tpu as pltpu


def _round_up(x, m):
    return ((x + m - 1) // m) * m


# ---------------------------------------------------------------------------
# Pallas kernel:  basis @ framesT -> power -> melW^T @ power -> log
#   frames block : (n_fft, TF)        bf16, frame index on lanes
#   basis        : (2*nfp, n_fft)     bf16  == [win*cos ; -win*sin]^T, nfp = round_up(n_freq, 8)
#   melWT        : (n_mels, nfp)      f32   == melW^T, zero-padded freq columns
#   out block    : (n_mels, TF)       f32, lane-dense store
# ---------------------------------------------------------------------------
def _logfbank_kernel(frames_ref, basis_ref, melwt_ref, out_ref, *, n_freq_pad):
    # One MXU pass over the frame tile: real & imag stacked on the M axis.
    z = jnp.dot(basis_ref[...], frames_ref[...],
                preferred_element_type=jnp.float32)            # (2*nfp, TF) f32
    real = z[:n_freq_pad, :]                                   # sublane-aligned split
    imag = z[n_freq_pad:, :]
    power = real * real + imag * imag                          # (nfp, TF) f32
    mel = jnp.dot(melwt_ref[...], power,
                  preferred_element_type=jnp.float32)          # (n_mels, TF) f32
    out_ref[...] = jnp.log(mel + 1e-6)                         # EUP log, f32


def _choose_time_tile(L):
    """Pick a lane tile (multiple of 128) over the flattened batch*frame axis.

    Large tiles amortize per-grid-step overhead; >=2 grid steps whenever
    possible so both v7x TensorCores get work; padding waste kept small.
    """
    L_pad = _round_up(max(L, 1), 128)
    nb = L_pad // 128
    if nb <= 1:
        tf = 128
    elif nb <= 8:
        tf = 128 * ((nb + 1) // 2)            # exactly two tiles (<=1 block pad)
    else:
        tf = 128
        for cand in (512, 384, 256, 128):     # largest tile wasting <= one block
            if _round_up(L_pad, cand) - L_pad <= 128:
                tf = cand
                break
    L_pad = _round_up(L_pad, tf)
    return tf, L_pad


def _pallas_logfbank(framesT, basis, melwt, *, n_freq_pad, tf):
    n_fft, L_pad = framesT.shape
    two_nfp = basis.shape[0]
    n_mels, nfp = melwt.shape
    nt = L_pad // tf

    kernel = functools.partial(_logfbank_kernel, n_freq_pad=n_freq_pad)

    flops = 2 * L_pad * n_fft * two_nfp + 2 * L_pad * nfp * n_mels
    bytes_accessed = int(framesT.size * framesT.dtype.itemsize
                         + basis.size * basis.dtype.itemsize
                         + melwt.size * melwt.dtype.itemsize
                         + n_mels * L_pad * 4)

    # Per-step VMEM: double-buffered operands/output + f32 intermediates,
    # with 2x headroom; never claim the whole physical VMEM (v7x = 64 MiB).
    itm = framesT.dtype.itemsize
    per_step = (2 * (n_fft * tf * itm            # frames tile
                     + two_nfp * n_fft * itm     # basis (constant)
                     + n_mels * nfp * 4          # melW^T (constant)
                     + n_mels * tf * 4)          # output tile
                + two_nfp * tf * 4               # z intermediate
                + nfp * tf * 4)                  # power intermediate
    vmem_limit = int(min(max(2 * per_step + (2 << 20), 8 << 20), 48 << 20))

    return pl.pallas_call(
        kernel,
        out_shape=jax.ShapeDtypeStruct((n_mels, L_pad), jnp.float32),
        grid_spec=pltpu.PrefetchScalarGridSpec(
            num_scalar_prefetch=0,
            grid=(nt,),
            in_specs=[
                pl.BlockSpec((n_fft, tf), lambda t: (0, t)),
                pl.BlockSpec((two_nfp, n_fft), lambda t: (0, 0)),
                pl.BlockSpec((n_mels, nfp), lambda t: (0, 0)),
            ],
            out_specs=pl.BlockSpec((n_mels, tf), lambda t: (0, t)),
        ),
        compiler_params=pltpu.CompilerParams(
            dimension_semantics=("parallel",),
            vmem_limit_bytes=vmem_limit),
        cost_estimate=pl.CostEstimate(
            flops=int(flops),
            transcendentals=int(n_mels * L_pad),
            bytes_accessed=bytes_accessed),
    )(framesT, basis, melwt)


# ---------------------------------------------------------------------------
# Constant construction: window / DFT basis / mel filterbank (deterministic)
# ---------------------------------------------------------------------------
def _hann_window(win_length):
    # torch.hann_window(periodic=True)
    n = jnp.arange(win_length, dtype=jnp.float32)
    return 0.5 * (1.0 - jnp.cos(2.0 * math.pi * n / win_length))


def _dft_matrices(n_fft):
    n_freq = n_fft // 2 + 1
    n = jnp.arange(n_fft, dtype=jnp.float32)[:, None]
    k = jnp.arange(n_freq, dtype=jnp.float32)[None, :]
    ang = 2.0 * math.pi * n * k / n_fft
    return jnp.cos(ang), -jnp.sin(ang)  # (n_fft, n_freq) each


def _mel_fbank(n_freq, f_min, f_max, n_mels, sample_rate):
    # torchaudio.functional.melscale_fbanks, mel_scale='htk', norm=None
    all_freqs = jnp.linspace(0.0, sample_rate / 2.0, n_freq)

    def hz_to_mel(f):
        return 2595.0 * jnp.log10(1.0 + f / 700.0)

    def mel_to_hz(m):
        return 700.0 * (10.0 ** (m / 2595.0) - 1.0)

    m_min = hz_to_mel(jnp.asarray(f_min, jnp.float32))
    m_max = hz_to_mel(jnp.asarray(f_max, jnp.float32))
    m_pts = jnp.linspace(m_min, m_max, n_mels + 2)
    f_pts = mel_to_hz(m_pts)

    f_diff = f_pts[1:] - f_pts[:-1]                     # (n_mels+1,)
    slopes = f_pts[None, :] - all_freqs[:, None]        # (n_freq, n_mels+2)
    down = -slopes[:, :-2] / f_diff[:-1]
    up = slopes[:, 2:] / f_diff[1:]
    fb = jnp.maximum(0.0, jnp.minimum(down, up))        # (n_freq, n_mels)
    return fb.astype(jnp.float32)


class LogFbankCal:
    """JAX/Pallas equivalent of the PyTorch logFbankCal module (eval path)."""

    def __init__(self, sample_rate, n_fft, win_length, hop_length, n_mels,
                 compute_dtype=jnp.bfloat16):
        self.sample_rate = sample_rate
        self.n_fft = n_fft
        self.win_length = win_length
        self.hop_length = hop_length
        self.n_mels = n_mels
        self.n_freq = n_fft // 2 + 1
        # Sublane (8) alignment only — keeps the real/imag split tile aligned
        # without inflating the dominant matmul's M dimension to 128 multiples.
        self.n_freq_pad = _round_up(self.n_freq, 8)
        self.compute_dtype = compute_dtype

        # torch.stft pads the window symmetrically to n_fft if shorter.
        win = _hann_window(win_length)
        pad_l = (n_fft - win_length) // 2
        pad_r = n_fft - win_length - pad_l
        window = jnp.pad(win, (pad_l, pad_r))            # (n_fft,)

        cos, msin = _dft_matrices(n_fft)                 # (n_fft, n_freq) each
        # Fold the window into the DFT basis (diagonal left-scaling).
        cosw = window[:, None] * cos
        sinw = window[:, None] * msin

        def pad_freq(m):
            return jnp.pad(m, ((0, 0), (0, self.n_freq_pad - self.n_freq)))

        # Concatenated, zero-padded basis transposed to (2*n_freq_pad, n_fft).
        basis = jnp.concatenate([pad_freq(cosw), pad_freq(sinw)], axis=1)
        self.basis = jnp.asarray(basis.T, dtype=compute_dtype)

        melW = _mel_fbank(self.n_freq, 0.0, sample_rate / 2.0,
                          n_mels, sample_rate)           # (n_freq, n_mels)
        melWT = jnp.pad(melW.T,
                        ((0, 0), (0, self.n_freq_pad - self.n_freq)))
        # Keep the power->mel matmul fully in f32 (small, precision-sensitive).
        self.melWT = jnp.asarray(melWT, dtype=jnp.float32)  # (n_mels, nfp)

    @functools.partial(jax.jit, static_argnums=0)
    def __call__(self, x):
        # x: (B, T_samples) float32
        B, T = x.shape
        pad = self.n_fft // 2
        xp = jnp.pad(x, ((0, 0), (pad, pad)), mode="reflect")  # center=True
        Tp = xp.shape[1]

        # torch.stft(center=True) gives T//hop + 1 frames; [..., :-1] drops one.
        F = T // self.hop_length

        # Gather frames directly into the lane-dense (n_fft, B*F) layout the
        # kernel consumes:  framesT[n, b*F + f] = xp[b, f*hop + n].
        starts = (jnp.arange(B)[:, None] * Tp
                  + jnp.arange(F)[None, :] * self.hop_length).reshape(-1)  # (B*F,)
        idx = jnp.arange(self.n_fft)[:, None] + starts[None, :]            # (n_fft, B*F)
        framesT = xp.reshape(-1)[idx].astype(self.compute_dtype)           # (n_fft, B*F)

        L = B * F
        tf, L_pad = _choose_time_tile(L)
        if L_pad > L:
            framesT = jnp.pad(framesT, ((0, 0), (0, L_pad - L)))

        out = _pallas_logfbank(framesT, self.basis, self.melWT,
                               n_freq_pad=self.n_freq_pad, tf=tf)  # (n_mels, L_pad)
        out = out[:, :L].reshape(self.n_mels, B, F).transpose(1, 0, 2)  # (B,n_mels,F)
        # Per-(batch, mel) time-demean on the tiny output (negligible cost).
        return out - jnp.mean(out, axis=2, keepdims=True)


# ---------------------------------------------------------------------------
# Pure-JAX reference (same math, same operand dtypes) for correctness check.
# ---------------------------------------------------------------------------
def _reference_logfbank(model, x):
    B, T = x.shape
    pad = model.n_fft // 2
    xp = jnp.pad(x, ((0, 0), (pad, pad)), mode="reflect")
    F = T // model.hop_length
    starts = jnp.arange(F) * model.hop_length
    idx = jnp.arange(model.n_fft)[:, None] + starts[None, :]
    framesT = xp[:, idx].astype(model.compute_dtype)               # (B,n_fft,F)
    z = jnp.einsum("kn,bnf->bkf", model.basis, framesT,
                   preferred_element_type=jnp.float32)
    nfp = model.n_freq_pad
    power = z[:, :nfp] ** 2 + z[:, nfp:] ** 2                      # f32
    mel = jnp.einsum("mk,bkf->bmf", model.melWT, power,
                     preferred_element_type=jnp.float32)
    logmel = jnp.log(mel + 1e-6)
    return logmel - logmel.mean(axis=2, keepdims=True)


if __name__ == "__main__":
    # Small, deterministic example.
    sample_rate = 16000
    n_fft = 64
    win_length = 64
    hop_length = 16
    n_mels = 16
    B, T = 2, 512

    key = jax.random.PRNGKey(0)
    x = jax.random.normal(key, (B, T), dtype=jnp.float32)

    model = LogFbankCal(sample_rate, n_fft, win_length, hop_length, n_mels)
    out = model(x)  # (B, n_mels, T//hop) = (2, 16, 32)
    jax.block_until_ready(out)

    F = T // hop_length
    assert out.shape == (B, n_mels, F), out.shape
    assert out.dtype == jnp.float32
    assert bool(jnp.all(jnp.isfinite(out)))
    # per-mel time-mean should be ~0 after demeaning
    assert float(jnp.max(jnp.abs(out.mean(axis=2)))) < 1e-4

    # Match the pure-JAX reference (same bf16 basis/frames, f32 power->mel).
    ref = _reference_logfbank(model, x)
    err = float(jnp.max(jnp.abs(out - ref)))
    assert err < 5e-2, err

    print("KERNEL_OK")
</pallas_src>

<mosaic_0001>
module attributes {stable_mosaic.version = 11 : i64} {
  func.func @_logfbank_kernel(%arg0: i32, %arg1: memref<64x128xbf16, #tpu.memory_space<vmem>>, %arg2: memref<80x64xbf16, #tpu.memory_space<vmem>>, %arg3: memref<16x40xf32, #tpu.memory_space<vmem>>, %arg4: memref<16x128xf32, #tpu.memory_space<vmem>>) attributes {dimension_semantics = [#tpu.dimension_semantics<parallel>], iteration_bounds = array<i64: 1>, scalar_prefetch = 0 : i64, scratch_operands = 0 : i64, tpu.core_type = #tpu.core_type<tc>, window_params = [{transform_indices = @transform_0, window_bounds = array<i64: 64, 128>}, {pipeline_mode = #tpu.pipeline_mode<synchronous>, transform_indices = @transform_1, window_bounds = array<i64: 80, 64>}, {pipeline_mode = #tpu.pipeline_mode<synchronous>, transform_indices = @transform_2, window_bounds = array<i64: 16, 40>}, {transform_indices = @transform_3, window_bounds = array<i64: 16, 128>}]} {
    %c0 = arith.constant 0 : index
    %c0_0 = arith.constant 0 : index
    %0 = vector.load %arg2[%c0, %c0_0] : memref<80x64xbf16, #tpu.memory_space<vmem>>, vector<80x64xbf16>
    %c0_1 = arith.constant 0 : index
    %c0_2 = arith.constant 0 : index
    %1 = vector.load %arg1[%c0_1, %c0_2] : memref<64x128xbf16, #tpu.memory_space<vmem>>, vector<64x128xbf16>
    %cst = arith.constant dense<0.000000e+00> : vector<80x128xf32>
    %2 = tpu.matmul %0, %1, %cst {dimension_numbers = #tpu.dot_dimension_numbers<[1], [0], [0], [1], [0, 0, 1, 1], [], []>} : vector<80x64xbf16>, vector<64x128xbf16>, vector<80x128xf32> -> vector<80x128xf32>
    %3 = vector.extract_strided_slice %2 {offsets = [0, 0], sizes = [40, 128], strides = [1, 1]} : vector<80x128xf32> to vector<40x128xf32>
    %4 = vector.extract_strided_slice %2 {offsets = [40, 0], sizes = [40, 128], strides = [1, 1]} : vector<80x128xf32> to vector<40x128xf32>
    %5 = arith.mulf %3, %3 : vector<40x128xf32>
    %6 = arith.mulf %4, %4 : vector<40x128xf32>
    %7 = arith.addf %5, %6 : vector<40x128xf32>
    %c0_3 = arith.constant 0 : index
    %c0_4 = arith.constant 0 : index
    %8 = vector.load %arg3[%c0_3, %c0_4] : memref<16x40xf32, #tpu.memory_space<vmem>>, vector<16x40xf32>
    %cst_5 = arith.constant dense<0.000000e+00> : vector<16x128xf32>
    %9 = tpu.matmul %8, %7, %cst_5 {dimension_numbers = #tpu.dot_dimension_numbers<[1], [0], [0], [1], [0, 0, 1, 1], [], []>} : vector<16x40xf32>, vector<40x128xf32>, vector<16x128xf32> -> vector<16x128xf32>
    %cst_6 = arith.constant 9.99999997E-7 : f32
    %10 = vector.broadcast %cst_6 : f32 to vector<16x128xf32>
    %11 = arith.addf %9, %10 : vector<16x128xf32>
    %12 = math.log %11 : vector<16x128xf32>
    %c0_7 = arith.constant 0 : index
    %c0_8 = arith.constant 0 : index
    %13 = vector.load %arg4[%c0_7, %c0_8] : memref<16x128xf32, #tpu.memory_space<vmem>>, vector<16x128xf32>
    tpu.vector_store %arg4[%c0_7, %c0_8], %12 {strides = array<i32>} : memref<16x128xf32, #tpu.memory_space<vmem>>, vector<16x128xf32>,
    return
  }
  func.func @transform_0(%arg0: i32) -> (i32, i32) {
    %c0_i32 = arith.constant 0 : i32
    %c0_i32_0 = arith.constant 0 : i32
    return %c0_i32, %arg0 : i32, i32
  }
  func.func @transform_1(%arg0: i32) -> (i32, i32) {
    %c0_i32 = arith.constant 0 : i32
    %c0_i32_0 = arith.constant 0 : i32
    %c0_i32_1 = arith.constant 0 : i32
    return %c0_i32, %c0_i32_0 : i32, i32
  }
  func.func @transform_2(%arg0: i32) -> (i32, i32) {
    %c0_i32 = arith.constant 0 : i32
    %c0_i32_0 = arith.constant 0 : i32
    %c0_i32_1 = arith.constant 0 : i32
    return %c0_i32, %c0_i32_0 : i32, i32
  }
  func.func @transform_3(%arg0: i32) -> (i32, i32) {
    %c0_i32 = arith.constant 0 : i32
    %c0_i32_0 = arith.constant 0 : i32
    return %c0_i32, %arg0 : i32, i32
  }
}

</mosaic_0001>

<llo_original>
// kernel: a_call__.1
$region0: #{a_call__.1}
  #allocation0 [shape = 'u32[]', space=smem, size = 0x4, offset = 0x4, fixed_abs, tag = 'smem constant byte address 0x4 - core index']
  #allocation1 [shape = 'u32[144,128]{1,0:T(1,128)}', space=vmem, size = 0x12000, scoped, tag = 'internal scratch']
  %s0 = inlined_call_operand.vmem [shape: bf16[64,128], index: 0, kind: input, shape index: {}]
  %s1 = inlined_call_operand.vmem [shape: bf16[80,64], index: 1, kind: input, shape index: {}]
  %s2 = inlined_call_operand.vmem [shape: f32[16,40], index: 2, kind: input, shape index: {}]
  %s3 = inlined_call_operand.vmem [shape: f32[16,128], index: 3, kind: output, shape index: {}]
  %s4 = sld [smem:[#allocation0]]
  $region22: #{a_call__.1} parent=0
    _
  %s6 = ssub.s32 1, %s4
  %s7 = scalar_select 0, %s6, %s4
  // Predicated region
  $region2: #{a_call__.1} parent=0 // pred_check
    _
  $region3: #{a_call__.1} parent=0 // pred_check_branch
    %9 = sbr.rel (0) target = $region5
  $region4: #{a_call__.1} parent=0 // pred_region
    _
  $region5: #{a_call__.1} parent=0 // pred_fallthru
    _
  // Predicated region
  $region6: #{a_call__.1} parent=0 // pred_check
    _
  $region7: #{a_call__.1} parent=0 // pred_check_branch
    %11 = sbr.rel (0) target = $region9
  $region8: #{a_call__.1} parent=0 // pred_region
    _
  $region9: #{a_call__.1} parent=0 // pred_fallthru
    _
  // Predicated region
  $region10: #{a_call__.1} parent=0 // pred_check
    _
  $region11: #{a_call__.1} parent=0 // pred_check_branch
    %13 = sbr.rel (0) target = $region13
  $region12: #{a_call__.1} parent=0 // pred_region
    _
  $region13: #{a_call__.1} parent=0 // pred_fallthru
    _
  %v15 = vld [vmem:[%s1] sm:$0xf]
  %v16 = vld [vmem:[%s1 + $0x4] sm:$0xf]
  %v17 = vld [vmem:[%s1 + $0x8] sm:$0xf]
  %v18 = vld [vmem:[%s1 + $0xc] sm:$0xf]
  %v19 = vld [vmem:[%s1 + $0x10] sm:$0xf]
  %v20 = vld [vmem:[%s1 + $0x14] sm:$0xf]
  %v21 = vld [vmem:[%s1 + $0x18] sm:$0xf]
  %v22 = vld [vmem:[%s1 + $0x1c] sm:$0xf]
  %v23 = vld [vmem:[%s1 + $0x20] sm:$0xf]
  %v24 = vld [vmem:[%s1 + $0x24] sm:$0xf]
  %v25 = vld [vmem:[%s0] sm:$0xf]
  %v26 = vld [vmem:[%s0 + $0x4] sm:$0xf]
  %v27 = vld [vmem:[%s0 + $0x8] sm:$0xf]
  %v28 = vld [vmem:[%s0 + $0xc] sm:$0xf]
  %v29 = vld [vmem:[%s0 + $0x10] sm:$0xf]
  %v30 = vld [vmem:[%s0 + $0x14] sm:$0xf]
  %v31 = vld [vmem:[%s0 + $0x18] sm:$0xf]
  %v32 = vld [vmem:[%s0 + $0x1c] sm:$0xf]
  %v43 = vunpack.c.l.b16 %v15
  %v44 = vunpack.c.l.b16 %v16
  %v45 = vunpack.c.l.b16 %v17
  %v46 = vunpack.c.l.b16 %v18
  %v47 = vunpack.c.l.b16 %v19
  %v48 = vunpack.c.l.b16 %v20
  %v49 = vunpack.c.l.b16 %v21
  %v50 = vunpack.c.l.b16 %v22
  %v51 = vunpack.c.l.b16 %v23
  %v52 = vunpack.c.l.b16 %v24
  %v53 = vpack.c.b16 %v44, %v43
  %v54 = vpack.c.b16 %v46, %v45
  %v55 = vpack.c.b16 %v48, %v47
  %v56 = vpack.c.b16 %v50, %v49
  %v57 = vpack.c.b16 %v52, %v51
  %v66 = vunpack.c.l.b16 %v25
  %v67 = vunpack.c.l.b16 %v26
  %v68 = vunpack.c.l.b16 %v27
  %v69 = vunpack.c.l.b16 %v28
  %v70 = vunpack.c.l.b16 %v29
  %v71 = vunpack.c.l.b16 %v30
  %v72 = vunpack.c.l.b16 %v31
  %v73 = vunpack.c.l.b16 %v32
  %v74 = vpack.c.b16 %v67, %v66
  %v75 = vpack.c.b16 %v69, %v68
  %v76 = vpack.c.b16 %v71, %v70
  %v77 = vpack.c.b16 %v73, %v72
  %vm82 = vcmask 523264
  %v84 = vsel %vm82, %v53, 0
  %v87 = vsel %vm82, %v54, 0
  %v90 = vsel %vm82, %v55, 0
  %v93 = vsel %vm82, %v56, 0
  %v96 = vsel %vm82, %v57, 0
  %98 = vmatprep.subr.bf16.mxu0 0
  %99 = vmatpush1.bf16.msra.mxu0 %v74
  %100 = vmatprep.subr.bf16.mxu0 0
  %101 = vmatpush1.bf16.msra.mxu0 %v75
  %102 = vmatprep.subr.bf16.mxu0 0
  %103 = vmatpush1.bf16.msra.mxu0 %v76
  %104 = vmatprep.subr.bf16.mxu0 0
  %105 = vmatpush1.bf16.msra.mxu0 %v77
  %106 = vmatprep.subr.bf16.mxu0 0
  %107 = vmatpush1.bf16.msra.mxu0 0
  %108 = vmatprep.subr.bf16.mxu0 0
  %109 = vmatpush1.bf16.msra.mxu0 0
  %110 = vmatprep.subr.bf16.mxu0 0
  %111 = vmatpush1.bf16.msra.mxu0 0
  %112 = vmatprep.subr.bf16.mxu0 0
  %113 = vmatpush1.bf16.msra.mxu0 0
  %114 = vmatprep.subr.bf16.mxu0 0
  %115 = vmatpush1.bf16.msra.mxu0 0
  %116 = vmatprep.subr.bf16.mxu0 0
  %117 = vmatpush1.bf16.msra.mxu0 0
  %118 = vmatprep.subr.bf16.mxu0 0
  %119 = vmatpush1.bf16.msra.mxu0 0
  %120 = vmatprep.subr.bf16.mxu0 0
  %121 = vmatpush1.bf16.msra.mxu0 0
  %122 = vmatprep.subr.bf16.mxu0 0
  %123 = vmatpush1.bf16.msra.mxu0 0
  %124 = vmatprep.subr.bf16.mxu0 0
  %125 = vmatpush1.bf16.msra.mxu0 0
  %126 = vmatprep.subr.bf16.mxu0 0
  %127 = vmatpush1.bf16.msra.mxu0 0
  %128 = vmatprep.subr.bf16.mxu0 0
  %129 = vmatpush1.bf16.msra.mxu0 0
  %130 = vmatprep.mubr.bf16.mxu0 0
  %131 = vmatmul.mubr.bf16.gmra.mrb[0].mxu0 %v84
  %v132 = vpop.f32.mrb[0].mxu0
  %v133 = vadd.f32 0.0, %v132
  %v134 = vpop.f32.mrb[0].mxu0
  %v135 = vpop.f32.mrb[0].mxu0
  %v136 = vadd.f32 0.0, %v135
  %v137 = vpop.f32.mrb[0].mxu0
  %138 = vmatprep.mubr.bf16.mxu0 0
  %139 = vmatmul.mubr.bf16.gmra.mrb[0].mxu0 %v87
  %v140 = vpop.f32.mrb[0].mxu0
  %v141 = vadd.f32 0.0, %v140
  %v142 = vpop.f32.mrb[0].mxu0
  %v143 = vpop.f32.mrb[0].mxu0
  %v144 = vadd.f32 0.0, %v143
  %v145 = vpop.f32.mrb[0].mxu0
  %146 = vmatprep.mubr.bf16.mxu0 0
  %147 = vmatmul.mubr.bf16.gmra.mrb[0].mxu0 %v90
  %v148 = vpop.f32.mrb[0].mxu0
  %v149 = vadd.f32 0.0, %v148
  %v150 = vpop.f32.mrb[0].mxu0
  %v151 = vpop.f32.mrb[0].mxu0
  %v152 = vadd.f32 0.0, %v151
  %v153 = vpop.f32.mrb[0].mxu0
  %154 = vmatprep.mubr.bf16.mxu0 0
  %155 = vmatmul.mubr.bf16.gmra.mrb[0].mxu0 %v93
  %v156 = vpop.f32.mrb[0].mxu0
  %v157 = vadd.f32 0.0, %v156
  %v158 = vpop.f32.mrb[0].mxu0
  %v159 = vpop.f32.mrb[0].mxu0
  %v160 = vadd.f32 0.0, %v159
  %v161 = vpop.f32.mrb[0].mxu0
  %162 = vmatprep.mubr.bf16.mxu0 0
  %163 = vmatmul.mubr.bf16.gmra.mrb[0].mxu0 %v96
  %v164 = vpop.f32.mrb[0].mxu0
  %v165 = vadd.f32 0.0, %v164
  %v166 = vpop.f32.mrb[0].mxu0
  %v167 = vpop.f32.mrb[0].mxu0
  %v168 = vadd.f32 0.0, %v167
  %v169 = vpop.f32.mrb[0].mxu0
  %170 = vdwg.mxu0
  %v171 = vmul.f32 %v133, %v133
  %v172 = vmul.f32 %v136, %v136
  %v173 = vmul.f32 %v141, %v141
  %v174 = vmul.f32 %v144, %v144
  %v175 = vmul.f32 %v149, %v149
  %v176 = vmul.f32 %v152, %v152
  %v177 = vmul.f32 %v157, %v157
  %v178 = vmul.f32 %v160, %v160
  %v179 = vmul.f32 %v165, %v165
  %v180 = vmul.f32 %v168, %v168
  %v181 = vadd.f32 %v171, %v176
  %v182 = vadd.f32 %v172, %v177
  %v183 = vadd.f32 %v173, %v178
  %v184 = vadd.f32 %v174, %v179
  %v185 = vadd.f32 %v175, %v180
  %v186 = vld [vmem:[%s2] sm:$0xff]
  %v187 = vld [vmem:[%s2 + $0x8] sm:$0xff]
  %vm188 = vcmask 326656
  %v190 = vsel %vm188, %v186, 0
  %v193 = vsel %vm188, %v187, 0
  %195 = vmatprep.subr.mxu0 0.0
  %196 = vmatpush1.msra.mxu0 %v181
  %197 = vmatprep.subr.mxu0 0.0
  %198 = vmatpush1.msra.mxu0 %v182
  %199 = vmatprep.subr.mxu0 0.0
  %200 = vmatpush1.msra.mxu0 %v183
  %201 = vmatprep.subr.mxu0 0.0
  %202 = vmatpush1.msra.mxu0 %v184
  %203 = vmatprep.subr.mxu0 0.0
  %204 = vmatpush1.msra.mxu0 %v185
  %205 = vmatprep.subr.mxu0 0.0
  %206 = vmatpush1.msra.mxu0 0.0
  %207 = vmatprep.subr.mxu0 0.0
  %208 = vmatpush1.msra.mxu0 0.0
  %209 = vmatprep.subr.mxu0 0.0
  %210 = vmatpush1.msra.mxu0 0.0
  %211 = vmatprep.subr.mxu0 0.0
  %212 = vmatpush1.msra.mxu0 0.0
  %213 = vmatprep.subr.mxu0 0.0
  %214 = vmatpush1.msra.mxu0 0.0
  %215 = vmatprep.subr.mxu0 0.0
  %216 = vmatpush1.msra.mxu0 0.0
  %217 = vmatprep.subr.mxu0 0.0
  %218 = vmatpush1.msra.mxu0 0.0
  %219 = vmatprep.subr.mxu0 0.0
  %220 = vmatpush1.msra.mxu0 0.0
  %221 = vmatprep.subr.mxu0 0.0
  %222 = vmatpush1.msra.mxu0 0.0
  %223 = vmatprep.subr.mxu0 0.0
  %224 = vmatpush1.msra.mxu0 0.0
  %225 = vmatprep.subr.mxu0 0.0
  %226 = vmatpush1.msra.mxu0 0.0
  %227 = vmatprep.subr.mxu0 0.0
  %228 = vmatpush1.msra.mxu0 0.0
  %229 = vmatprep.subr.mxu0 0.0
  %230 = vmatpush1.msra.mxu0 0.0
  %231 = vmatprep.subr.mxu0 0.0
  %232 = vmatpush1.msra.mxu0 0.0
  %233 = vmatprep.subr.mxu0 0.0
  %234 = vmatpush1.msra.mxu0 0.0
  %235 = vmatprep.subr.mxu0 0.0
  %236 = vmatpush1.msra.mxu0 0.0
  %237 = vmatprep.subr.mxu0 0.0
  %238 = vmatpush1.msra.mxu0 0.0
  %239 = vmatprep.subr.mxu0 0.0
  %240 = vmatpush1.msra.mxu0 0.0
  %241 = vmatprep.subr.mxu0 0.0
  %242 = vmatpush1.msra.mxu0 0.0
  %243 = vmatprep.subr.mxu0 0.0
  %244 = vmatpush1.msra.mxu0 0.0
  %245 = vmatprep.subr.mxu0 0.0
  %246 = vmatpush1.msra.mxu0 0.0
  %247 = vmatprep.subr.mxu0 0.0
  %248 = vmatpush1.msra.mxu0 0.0
  %249 = vmatprep.subr.mxu0 0.0
  %250 = vmatpush1.msra.mxu0 0.0
  %251 = vmatprep.subr.mxu0 0.0
  %252 = vmatpush1.msra.mxu0 0.0
  %253 = vmatprep.subr.mxu0 0.0
  %254 = vmatpush1.msra.mxu0 0.0
  %255 = vmatprep.subr.mxu0 0.0
  %256 = vmatpush1.msra.mxu0 0.0
  %257 = vmatprep.subr.mxu0 0.0
  %258 = vmatpush1.msra.mxu0 0.0
  %259 = vmatprep.mubr.f32.mxu0 0.0
  %260 = vmatmul.mubr.f32.gmra.mrb[0].mxu0 %v190
  %v261 = vpop.f32.mrb[0].mxu0
  %v262 = vadd.f32 1e-06, %v261
  %v263 = vpop.f32.mrb[0].mxu0
  %264 = vmatprep.mubr.f32.mxu0 0.0
  %265 = vmatmul.mubr.f32.gmra.mrb[0].mxu0 %v193
  %v266 = vpop.f32.mrb[0].mxu0
  %v267 = vadd.f32 1e-06, %v266
  %v268 = vpop.f32.mrb[0].mxu0
  %269 = vdwg.mxu0
  %v270 = vlog2.pop %v262
  %v271 = vmul.f32 %v270, 0.6931472
  %v272 = vlog2.pop %v267
  %v273 = vmul.f32 %v272, 0.6931472
  %274 = vst [vmem:[%s3] sm:$0xff] %v271
  %275 = vst [vmem:[%s3 + $0x8] sm:$0xff] %v273
  // Predicated region
  $region14: #{a_call__.1} parent=0 // pred_check
    _
  $region15: #{a_call__.1} parent=0 // pred_check_branch
    %277 = sbr.rel (0) target = $region17
  $region16: #{a_call__.1} parent=0 // pred_region
    _
  $region17: #{a_call__.1} parent=0 // pred_fallthru
    _
  // Predicated region
  $region18: #{a_call__.1} parent=0 // pred_check
    _
  $region19: #{a_call__.1} parent=0 // pred_check_branch
    %279 = sbr.rel (0) target = $region21
  $region20: #{a_call__.1} parent=0 // pred_region
    _
  $region21: #{a_call__.1} parent=0 // pred_fallthru
    _

</llo_original>
